<compile_context>
chip_gen: v6e
topology: v6e:2x2x1
jax: 0.10.0
libtpu: 0.0.40
codegen_flags: <defaults>
</compile_context>

<pallas_src>
import functools

import jax
import jax.numpy as jnp
from jax.experimental import pallas as pl
from jax.experimental.pallas import tpu as pltpu

HIDDEN = 256  # fixed by the module: BayesianLinear(input_dim, 256), (256, 256), (256, output_dim)


def _round_up(n, m):
    return ((n + m - 1) // m) * m


def _affine_kernel(x_ref, w_ref, b_ref, o_ref):
    # x_ref: (tb, input_dim) f32   w_ref: (input_dim, output_dim) f32 (grid-invariant)
    # b_ref: (1, output_dim) f32   o_ref: (tb, output_dim) f32
    o_ref[...] = (
        jnp.dot(x_ref[...], w_ref[...], preferred_element_type=jnp.float32) + b_ref[...]
    ).astype(o_ref.dtype)


def _batch_tile(B, block_b):
    """Pick the batch tile (static, trace-time)."""
    if B <= block_b:
        if B >= 16:
            # >= 2 grid steps so ("parallel",) can shard across both v7x TensorCores.
            return _round_up(-(-B // 2), 8)
        return B  # tiny batch: single full block (block dim == array dim is allowed)
    return max(8, (block_b // 8) * 8)


@functools.partial(jax.jit, static_argnames=("block_b",))
def bayesian_regressor_forward(x, w1, b1, w2, b2, w3, b3, *, block_b=2048):
    """Forward pass of BayesianRegressor with already-sampled weights.

    x:  [B, input_dim] f32
    wi: [out_features, in_features] f32 (PyTorch nn.Linear layout)
    bi: [out_features] f32
    """
    B, input_dim = x.shape
    output_dim = w3.shape[0]

    # Compose the three affine layers into one (tiny f32 GEMMs; HIGHEST precision so
    # the composition contributes essentially no extra rounding vs the layer-wise
    # reference — the only remaining rounding is the kernel's one small dot).
    hi = jax.lax.Precision.HIGHEST
    w_eff = jnp.dot(jnp.dot(w1.T, w2.T, precision=hi), w3.T, precision=hi)  # [in, out]
    b_eff = jnp.dot(jnp.dot(b1, w2.T, precision=hi) + b2, w3.T, precision=hi) + b3
    w_eff = w_eff.astype(jnp.float32)
    b_eff = b_eff.reshape(1, output_dim).astype(jnp.float32)

    tb = _batch_tile(B, block_b)
    grid = (pl.cdiv(B, tb),)

    # W_eff / b_eff have constant index maps -> resident in VMEM across all grid steps.
    # NOTE: for B % tb != 0 the rows past B in the last block hold unspecified data;
    # there is no cross-row reduction and OOB writes are dropped, so valid rows are
    # unaffected.
    return pl.pallas_call(
        _affine_kernel,
        out_shape=jax.ShapeDtypeStruct((B, output_dim), jnp.float32),
        grid_spec=pltpu.PrefetchScalarGridSpec(
            num_scalar_prefetch=0,
            grid=grid,
            in_specs=[
                pl.BlockSpec((tb, input_dim), lambda i: (i, 0)),          # x tile (unpadded)
                pl.BlockSpec((input_dim, output_dim), lambda i: (0, 0)),  # W_eff (resident)
                pl.BlockSpec((1, output_dim), lambda i: (0, 0)),          # b_eff (resident)
            ],
            out_specs=pl.BlockSpec((tb, output_dim), lambda i: (i, 0)),
        ),
        compiler_params=pltpu.CompilerParams(
            dimension_semantics=("parallel",),
        ),
    )(x.astype(jnp.float32), w_eff, b_eff)


# ---------------------------------------------------------------------------
# Host-side parameter init + posterior sampling (blitz BayesianLinear defaults)
# ---------------------------------------------------------------------------
def _init_bayesian_linear(key, in_features, out_features):
    """weight_mu ~ N(0, 0.1), weight_rho ~ N(-7, 0.1); same for bias."""
    k_mu_w, k_rho_w, k_mu_b, k_rho_b = jax.random.split(key, 4)
    w_mu = 0.1 * jax.random.normal(k_mu_w, (out_features, in_features), jnp.float32)
    w_rho = -7.0 + 0.1 * jax.random.normal(k_rho_w, (out_features, in_features), jnp.float32)
    b_mu = 0.1 * jax.random.normal(k_mu_b, (out_features,), jnp.float32)
    b_rho = -7.0 + 0.1 * jax.random.normal(k_rho_b, (out_features,), jnp.float32)
    return w_mu, w_rho, b_mu, b_rho


def _sample_bayesian_linear(key, params):
    """theta = mu + softplus(rho) * eps (one draw per forward, as in BayesianLinear)."""
    w_mu, w_rho, b_mu, b_rho = params
    k_w, k_b = jax.random.split(key)
    w = w_mu + jax.nn.softplus(w_rho) * jax.random.normal(k_w, w_mu.shape, jnp.float32)
    b = b_mu + jax.nn.softplus(b_rho) * jax.random.normal(k_b, b_mu.shape, jnp.float32)
    return w, b


def reference_forward_f32(x, w1, b1, w2, b2, w3, b3):
    """Layer-by-layer f32 reference (full-precision dots)."""
    hi = jax.lax.Precision.HIGHEST
    h1 = jnp.dot(x, w1.T, precision=hi) + b1
    h2 = jnp.dot(h1, w2.T, precision=hi) + b2
    return jnp.dot(h2, w3.T, precision=hi) + b3


if __name__ == "__main__":
    # Small shapes consistent with the module's forward: x is [batch, input_dim].
    batch, input_dim, output_dim = 8, 8, 4

    root = jax.random.PRNGKey(0)
    k_x, k_l1, k_l2, k_l3, k_s1, k_s2, k_s3 = jax.random.split(root, 7)

    x = jax.random.normal(k_x, (batch, input_dim), jnp.float32)

    p1 = _init_bayesian_linear(k_l1, input_dim, HIDDEN)
    p2 = _init_bayesian_linear(k_l2, HIDDEN, HIDDEN)
    p3 = _init_bayesian_linear(k_l3, HIDDEN, output_dim)

    # One stochastic weight draw per forward call (as in BayesianLinear.forward).
    w1, b1 = _sample_bayesian_linear(k_s1, p1)
    w2, b2 = _sample_bayesian_linear(k_s2, p2)
    w3, b3 = _sample_bayesian_linear(k_s3, p3)

    out = bayesian_regressor_forward(x, w1, b1, w2, b2, w3, b3)
    out = jax.block_until_ready(out)
    assert out.shape == (batch, output_dim)

    # Check against the layer-by-layer f32 reference (same sampled weights).
    ref = reference_forward_f32(x, w1, b1, w2, b2, w3, b3)
    assert jnp.allclose(out, ref, atol=5e-2, rtol=5e-2), "mismatch vs f32 reference"

    print("KERNEL_OK")
</pallas_src>

<mosaic_0001>
module attributes {stable_mosaic.version = 11 : i64} {
  func.func @_affine_kernel(%arg0: i32, %arg1: memref<8x8xf32, #tpu.memory_space<vmem>>, %arg2: memref<8x4xf32, #tpu.memory_space<vmem>>, %arg3: memref<1x4xf32, #tpu.memory_space<vmem>>, %arg4: memref<8x4xf32, #tpu.memory_space<vmem>>) attributes {dimension_semantics = [#tpu.dimension_semantics<parallel>], iteration_bounds = array<i64: 1>, scalar_prefetch = 0 : i64, scratch_operands = 0 : i64, tpu.core_type = #tpu.core_type<tc>, window_params = [{transform_indices = @transform_0, window_bounds = array<i64: 8, 8>}, {pipeline_mode = #tpu.pipeline_mode<synchronous>, transform_indices = @transform_1, window_bounds = array<i64: 8, 4>}, {pipeline_mode = #tpu.pipeline_mode<synchronous>, transform_indices = @transform_2, window_bounds = array<i64: 1, 4>}, {transform_indices = @transform_3, window_bounds = array<i64: 8, 4>}]} {
    %c0 = arith.constant 0 : index
    %c0_0 = arith.constant 0 : index
    %0 = vector.load %arg1[%c0, %c0_0] : memref<8x8xf32, #tpu.memory_space<vmem>>, vector<8x8xf32>
    %c0_1 = arith.constant 0 : index
    %c0_2 = arith.constant 0 : index
    %1 = vector.load %arg2[%c0_1, %c0_2] : memref<8x4xf32, #tpu.memory_space<vmem>>, vector<8x4xf32>
    %cst = arith.constant dense<0.000000e+00> : vector<8x4xf32>
    %2 = tpu.matmul %0, %1, %cst {dimension_numbers = #tpu.dot_dimension_numbers<[1], [0], [0], [1], [0, 0, 1, 1], [], []>} : vector<8x8xf32>, vector<8x4xf32>, vector<8x4xf32> -> vector<8x4xf32>
    %c0_3 = arith.constant 0 : index
    %c0_4 = arith.constant 0 : index
    %3 = vector.load %arg3[%c0_3, %c0_4] : memref<1x4xf32, #tpu.memory_space<vmem>>, vector<1x4xf32>
    %4 = vector.broadcast %3 : vector<1x4xf32> to vector<8x4xf32>
    %5 = arith.addf %2, %4 : vector<8x4xf32>
    %c0_5 = arith.constant 0 : index
    %c0_6 = arith.constant 0 : index
    %6 = vector.load %arg4[%c0_5, %c0_6] : memref<8x4xf32, #tpu.memory_space<vmem>>, vector<8x4xf32>
    tpu.vector_store %arg4[%c0_5, %c0_6], %5 {strides = array<i32>} : memref<8x4xf32, #tpu.memory_space<vmem>>, vector<8x4xf32>,
    return
  }
  func.func @transform_0(%arg0: i32) -> (i32, i32) {
    %c0_i32 = arith.constant 0 : i32
    %c0_i32_0 = arith.constant 0 : i32
    return %arg0, %c0_i32 : i32, i32
  }
  func.func @transform_1(%arg0: i32) -> (i32, i32) {
    %c0_i32 = arith.constant 0 : i32
    %c0_i32_0 = arith.constant 0 : i32
    %c0_i32_1 = arith.constant 0 : i32
    return %c0_i32, %c0_i32_0 : i32, i32
  }
  func.func @transform_2(%arg0: i32) -> (i32, i32) {
    %c0_i32 = arith.constant 0 : i32
    %c0_i32_0 = arith.constant 0 : i32
    %c0_i32_1 = arith.constant 0 : i32
    return %c0_i32, %c0_i32_0 : i32, i32
  }
  func.func @transform_3(%arg0: i32) -> (i32, i32) {
    %c0_i32 = arith.constant 0 : i32
    %c0_i32_0 = arith.constant 0 : i32
    return %arg0, %c0_i32 : i32, i32
  }
}

</mosaic_0001>

<llo_original>
// kernel: bayesian_regressor_forward.1
$region0: #{bayesian_regressor_forward.1}
  #allocation0 [shape = 'u32[]', space=smem, size = 0x4, offset = 0x4, fixed_abs, tag = 'smem constant byte address 0x4 - core index']
  #allocation1 [shape = 'u32[144,128]{1,0:T(1,128)}', space=vmem, size = 0x12000, scoped, tag = 'internal scratch']
  %s0 = inlined_call_operand.vmem [shape: f32[8,8], index: 0, kind: input, shape index: {}]
  %s1 = inlined_call_operand.vmem [shape: f32[8,4], index: 1, kind: input, shape index: {}]
  %s2 = inlined_call_operand.vmem [shape: f32[1,4], index: 2, kind: input, shape index: {}]
  %s3 = inlined_call_operand.vmem [shape: f32[8,4], index: 3, kind: output, shape index: {}]
  %s4 = sld [smem:[#allocation0]]
  $region22: #{bayesian_regressor_forward.1} parent=0
    _
  %s6 = ssub.s32 1, %s4
  %s7 = scalar_select 0, %s6, %s4
  // Predicated region
  $region2: #{bayesian_regressor_forward.1} parent=0 // pred_check
    _
  $region3: #{bayesian_regressor_forward.1} parent=0 // pred_check_branch
    %9 = sbr.rel (0) target = $region5
  $region4: #{bayesian_regressor_forward.1} parent=0 // pred_region
    _
  $region5: #{bayesian_regressor_forward.1} parent=0 // pred_fallthru
    _
  // Predicated region
  $region6: #{bayesian_regressor_forward.1} parent=0 // pred_check
    _
  $region7: #{bayesian_regressor_forward.1} parent=0 // pred_check_branch
    %11 = sbr.rel (0) target = $region9
  $region8: #{bayesian_regressor_forward.1} parent=0 // pred_region
    _
  $region9: #{bayesian_regressor_forward.1} parent=0 // pred_fallthru
    _
  // Predicated region
  $region10: #{bayesian_regressor_forward.1} parent=0 // pred_check
    _
  $region11: #{bayesian_regressor_forward.1} parent=0 // pred_check_branch
    %13 = sbr.rel (0) target = $region13
  $region12: #{bayesian_regressor_forward.1} parent=0 // pred_region
    _
  $region13: #{bayesian_regressor_forward.1} parent=0 // pred_fallthru
    _
  %v14 = vld [vmem:[%s0] sm:$0xff]
  %v15 = vld [vmem:[%s1] sm:$0xff]
  %v16 = vld [vmem:[%s2] sm:$0x1]
  %v18 = vlaneseq
  %v19 = vshrl.u32 %v18, 7
  %v20 = vsub.s32 0, %v19
  %v21 = vrot.slane %v16, %v20
  %vm23 = vcmask 64512
  %v25 = vsel %vm23, %v14, 0
  %27 = vmatprep.subr.mxu0 0.0
  %28 = vmatpush1.msra.mxu0 0.0
  %29 = vmatprep.subr.mxu0 0.0
  %30 = vmatpush1.msra.mxu0 0.0
  %31 = vmatprep.subr.mxu0 0.0
  %32 = vmatpush1.msra.mxu0 0.0
  %33 = vmatprep.subr.mxu0 0.0
  %34 = vmatpush1.msra.mxu0 0.0
  %35 = vmatprep.subr.mxu0 0.0
  %36 = vmatpush1.msra.mxu0 0.0
  %37 = vmatprep.subr.mxu0 0.0
  %38 = vmatpush1.msra.mxu0 0.0
  %39 = vmatprep.subr.mxu0 0.0
  %40 = vmatpush1.msra.mxu0 0.0
  %41 = vmatprep.subr.mxu0 0.0
  %42 = vmatpush1.msra.mxu0 0.0
  %43 = vmatprep.subr.mxu0 0.0
  %44 = vmatpush1.msra.mxu0 0.0
  %45 = vmatprep.subr.mxu0 0.0
  %46 = vmatpush1.msra.mxu0 0.0
  %47 = vmatprep.subr.mxu0 0.0
  %48 = vmatpush1.msra.mxu0 0.0
  %49 = vmatprep.subr.mxu0 0.0
  %50 = vmatpush1.msra.mxu0 0.0
  %51 = vmatprep.subr.mxu0 0.0
  %52 = vmatpush1.msra.mxu0 0.0
  %53 = vmatprep.subr.mxu0 0.0
  %54 = vmatpush1.msra.mxu0 0.0
  %55 = vmatprep.subr.mxu0 0.0
  %56 = vmatpush1.msra.mxu0 0.0
  %57 = vmatprep.subr.mxu0 0.0
  %58 = vmatpush1.msra.mxu0 %v15
  %59 = vmatprep.subr.mxu0 0.0
  %60 = vmatpush2.msra.mxu0 0.0
  %61 = vmatprep.subr.mxu0 0.0
  %62 = vmatpush2.msra.mxu0 0.0
  %63 = vmatprep.subr.mxu0 0.0
  %64 = vmatpush2.msra.mxu0 0.0
  %65 = vmatprep.subr.mxu0 0.0
  %66 = vmatpush2.msra.mxu0 0.0
  %67 = vmatprep.subr.mxu0 0.0
  %68 = vmatpush2.msra.mxu0 0.0
  %69 = vmatprep.subr.mxu0 0.0
  %70 = vmatpush2.msra.mxu0 0.0
  %71 = vmatprep.subr.mxu0 0.0
  %72 = vmatpush2.msra.mxu0 0.0
  %73 = vmatprep.subr.mxu0 0.0
  %74 = vmatpush2.msra.mxu0 0.0
  %75 = vmatprep.subr.mxu0 0.0
  %76 = vmatpush2.msra.mxu0 0.0
  %77 = vmatprep.subr.mxu0 0.0
  %78 = vmatpush2.msra.mxu0 0.0
  %79 = vmatprep.subr.mxu0 0.0
  %80 = vmatpush2.msra.mxu0 0.0
  %81 = vmatprep.subr.mxu0 0.0
  %82 = vmatpush2.msra.mxu0 0.0
  %83 = vmatprep.subr.mxu0 0.0
  %84 = vmatpush2.msra.mxu0 0.0
  %85 = vmatprep.subr.mxu0 0.0
  %86 = vmatpush2.msra.mxu0 0.0
  %87 = vmatprep.subr.mxu0 0.0
  %88 = vmatpush2.msra.mxu0 0.0
  %89 = vmatprep.subr.mxu0 0.0
  %90 = vmatpush2.msra.mxu0 0.0
  %91 = vmatprep.mubr.f32.mxu0 0.0
  %92 = vmatmul.mubr.f32.gmra.mxu0 %v25
  %v93 = vpop.f32.mrf.mxu0
  %v94 = vadd.f32 %v21, %v93
  %v95 = vpop.f32.mrf.mxu0
  %96 = vdwg.mxu0
  %vm97 = vcmask 31744
  %98 = vst.msk [vmem:[%s3] sm:$0xff] %vm97, %v94
  // Predicated region
  $region14: #{bayesian_regressor_forward.1} parent=0 // pred_check
    _
  $region15: #{bayesian_regressor_forward.1} parent=0 // pred_check_branch
    %100 = sbr.rel (0) target = $region17
  $region16: #{bayesian_regressor_forward.1} parent=0 // pred_region
    _
  $region17: #{bayesian_regressor_forward.1} parent=0 // pred_fallthru
    _
  // Predicated region
  $region18: #{bayesian_regressor_forward.1} parent=0 // pred_check
    _
  $region19: #{bayesian_regressor_forward.1} parent=0 // pred_check_branch
    %102 = sbr.rel (0) target = $region21
  $region20: #{bayesian_regressor_forward.1} parent=0 // pred_region
    _
  $region21: #{bayesian_regressor_forward.1} parent=0 // pred_fallthru
    _

</llo_original>
